<compile_context>
chip_gen: v5e
topology: v5e:2x2
jax: 0.10.0
libtpu: 0.0.40
codegen_flags: <defaults>
</compile_context>

<pallas_src>
import functools

import jax
import jax.numpy as jnp
from jax.experimental import pallas as pl
from jax.experimental.pallas import tpu as pltpu


def _round_up(v, m):
    return -(-v // m) * m


def _sliding_window_sum(xp, k, out_len):
    """Sliding sum of k consecutive rows along axis 1 of xp (B, out_len+k-1, C).

    Log-step doubling: build power-of-two window sums, then combine the binary
    decomposition of k.  ~floor(log2 k) + popcount(k) - 1 shifted adds instead
    of k-1 unaligned slice+adds.
    """
    if k == 1:
        return xp[:, :out_len, :]
    sums = {1: xp}
    s = xp
    w = 1
    while 2 * w <= k:
        n = s.shape[1] - w
        s = s[:, :n, :] + s[:, w:w + n, :]
        w *= 2
        sums[w] = s
    total = None
    off = 0
    rem = k
    while rem > 0:
        p = 1 << (rem.bit_length() - 1)
        seg = sums[p][:, off:off + out_len, :]
        total = seg if total is None else total + seg
        off += p
        rem -= p
    return total


def _decomp_kernel(x_ref, mean_ref, res_ref, xpad_ref, *, kernel_size):
    """Per-block sliding-window mean + residual.

    x_ref    : (Bt, L, Ct)                     input block (time on sublanes)
    mean_ref : (Bt, L, Ct)                     moving-average output
    res_ref  : (Bt, L, Ct)                     residual output
    xpad_ref : (Bt, L + k - 1, Ct) f32 VMEM    replicate-padded scratch
    """
    bt, L, ct = x_ref.shape
    pad = (kernel_size - 1) // 2

    xf = x_ref[...].astype(jnp.float32)

    # Replicate-padded sequence built entirely in VMEM scratch.
    xpad_ref[:, pad:pad + L, :] = xf
    if pad > 0:
        xpad_ref[:, 0:pad, :] = jnp.broadcast_to(xf[:, 0:1, :], (bt, pad, ct))
        xpad_ref[:, pad + L:pad + L + pad, :] = jnp.broadcast_to(
            xf[:, L - 1:L, :], (bt, pad, ct))

    xp = xpad_ref[...]                                    # (Bt, L + k - 1, Ct)
    win = _sliding_window_sum(xp, kernel_size, L)         # (Bt, L, Ct)
    mean = win * (1.0 / kernel_size)

    mean_ref[...] = mean.astype(mean_ref.dtype)
    # Residual from the already-loaded block (no second HBM read of x).
    res_ref[...] = (xf - mean).astype(res_ref.dtype)


def _decomp_pallas(x3, kernel_size):
    """Run the decomposition kernel on a [B', L, C'] array."""
    Bp, L, Cp = x3.shape
    itemsize = jnp.dtype(x3.dtype).itemsize
    pad_rows = L + kernel_size - 1

    # Lane-tile selection: full width when small, else a multiple of 128
    # bounded so the f32 scratch per block stays around ~2 MiB.
    if Cp <= 512:
        Ct = Cp
    else:
        max_ct = max(128, ((2 << 20) // (4 * max(pad_rows, 1))) // 128 * 128)
        Ct = min(512, max_ct)

    # Batch-tile selection: keep per-block VMEM working set ~<= 2 MiB.
    lane_pad = _round_up(Ct, 128)
    Lp8 = _round_up(L, 8)
    Pp8 = _round_up(pad_rows, 8)
    per_b = 3 * Lp8 * lane_pad * itemsize + Pp8 * lane_pad * 4
    Bt = max(1, min(Bp, (2 << 20) // max(per_b, 1)))

    grid = (pl.cdiv(Bp, Bt), pl.cdiv(Cp, Ct))

    vmem_needed = (2 * 3 * Bt * Lp8 * lane_pad * itemsize   # double-buffered in/out
                   + Bt * Pp8 * lane_pad * 4                # scratch
                   + (4 << 20))                             # headroom
    vmem_limit = int(min(max(vmem_needed, 16 << 20), 64 << 20))

    kernel = functools.partial(_decomp_kernel, kernel_size=kernel_size)
    blk = lambda b, c: (b, 0, c)

    mean, res = pl.pallas_call(
        kernel,
        out_shape=(
            jax.ShapeDtypeStruct((Bp, L, Cp), x3.dtype),
            jax.ShapeDtypeStruct((Bp, L, Cp), x3.dtype),
        ),
        grid_spec=pltpu.PrefetchScalarGridSpec(
            num_scalar_prefetch=0,
            grid=grid,
            in_specs=[pl.BlockSpec((Bt, L, Ct), blk)],
            out_specs=[
                pl.BlockSpec((Bt, L, Ct), blk),
                pl.BlockSpec((Bt, L, Ct), blk),
            ],
            scratch_shapes=[
                pltpu.VMEM((Bt, pad_rows, Ct), jnp.float32),
            ],
        ),
        compiler_params=pltpu.CompilerParams(
            dimension_semantics=("parallel", "parallel"),
            vmem_limit_bytes=vmem_limit,
        ),
    )(x3)
    return mean, res


def series_decomp(x, kernel_size):
    """JAX/Pallas equivalent of series_decomp(kernel_size).forward(x).

    x: [B, L, C] float array. Returns (moving_mean, res), each [B, L, C].
    """
    if kernel_size < 1 or kernel_size % 2 != 1:
        # Even k gives pooled length L-1 in the original module -> shape error.
        raise ValueError("series_decomp requires an odd kernel_size >= 1")

    B, L, C = x.shape

    # Very small channel counts: fold batch onto the 128-lane axis so the
    # kernel is not lane-starved. Otherwise operate directly on [B, L, C]
    # (no relayout, minimal HBM traffic).
    fold = (C < 16) and (B > 1)
    if fold:
        x_in = jnp.transpose(x, (1, 0, 2)).reshape(1, L, B * C)
    else:
        x_in = x

    mean_k, res_k = _decomp_pallas(x_in, kernel_size)

    if fold:
        mean = jnp.transpose(mean_k.reshape(L, B, C), (1, 0, 2))
        res = jnp.transpose(res_k.reshape(L, B, C), (1, 0, 2))
    else:
        mean, res = mean_k, res_k
    return mean, res


def _reference(x, kernel_size):
    """Pure-JAX reference mirroring the PyTorch module exactly."""
    pad = (kernel_size - 1) // 2
    front = jnp.repeat(x[:, 0:1, :], pad, axis=1)
    end = jnp.repeat(x[:, -1:, :], pad, axis=1)
    xp = jnp.concatenate([front, x, end], axis=1)
    L = x.shape[1]
    windows = jnp.stack([xp[:, j:j + L, :] for j in range(kernel_size)], axis=0)
    mean = jnp.mean(windows, axis=0)
    return mean, x - mean


if __name__ == "__main__":
    key = jax.random.PRNGKey(0)

    # (B, L, C, kernel_size): default k=25, small-window checks, and
    # both code paths (batch-fold for small C, direct blocking for larger C).
    cases = [
        (2, 48, 8, 25),    # fold path, default kernel size
        (2, 16, 4, 5),     # fold path, small window
        (3, 32, 136, 7),   # direct path, C > 128 (full-C lane block)
        (2, 40, 32, 9),    # direct path, moderate C
    ]
    for (B, L, C, k) in cases:
        key, sub = jax.random.split(key)
        x = jax.random.normal(sub, (B, L, C), dtype=jnp.float32)

        mean, res = series_decomp(x, k)
        mean = jax.block_until_ready(mean)
        res = jax.block_until_ready(res)

        mean_ref, res_ref = _reference(x, k)
        assert jnp.allclose(mean, mean_ref, atol=1e-5, rtol=1e-5)
        assert jnp.allclose(res, res_ref, atol=1e-5, rtol=1e-5)
        # Decomposition identity: mean + res == x
        assert jnp.allclose(mean + res, x, atol=1e-5, rtol=1e-5)

    print("KERNEL_OK")
</pallas_src>

<mosaic_0001>
module attributes {stable_mosaic.version = 11 : i64} {
  func.func @_decomp_kernel(%arg0: i32, %arg1: i32, %arg2: memref<1x48x16xf32, #tpu.memory_space<vmem>>, %arg3: memref<1x48x16xf32, #tpu.memory_space<vmem>>, %arg4: memref<1x48x16xf32, #tpu.memory_space<vmem>>, %arg5: memref<1x72x16xf32, #tpu.memory_space<vmem>>) attributes {dimension_semantics = [#tpu.dimension_semantics<parallel>, #tpu.dimension_semantics<parallel>], iteration_bounds = array<i64: 1, 1>, scalar_prefetch = 0 : i64, scratch_operands = 1 : i64, tpu.core_type = #tpu.core_type<tc>, window_params = [{transform_indices = @transform_0, window_bounds = array<i64: 1, 48, 16>}, {transform_indices = @transform_1, window_bounds = array<i64: 1, 48, 16>}, {transform_indices = @transform_2, window_bounds = array<i64: 1, 48, 16>}]} {
    %c0 = arith.constant 0 : index
    %c0_0 = arith.constant 0 : index
    %c0_1 = arith.constant 0 : index
    %0 = vector.load %arg2[%c0, %c0_0, %c0_1] : memref<1x48x16xf32, #tpu.memory_space<vmem>>, vector<1x48x16xf32>
    %c0_2 = arith.constant 0 : index
    %c12 = arith.constant 12 : index
    %c0_3 = arith.constant 0 : index
    %1 = vector.load %arg5[%c0_2, %c12, %c0_3] : memref<1x72x16xf32, #tpu.memory_space<vmem>>, vector<1x48x16xf32>
    tpu.vector_store %arg5[%c0_2, %c12, %c0_3], %0 {strides = array<i32>} : memref<1x72x16xf32, #tpu.memory_space<vmem>>, vector<1x48x16xf32>,
    %2 = vector.extract_strided_slice %0 {offsets = [0, 0, 0], sizes = [1, 1, 16], strides = [1, 1, 1]} : vector<1x48x16xf32> to vector<1x1x16xf32>
    %3 = vector.shape_cast %2 : vector<1x1x16xf32> to vector<1x1x16xf32>
    %4 = vector.broadcast %3 : vector<1x1x16xf32> to vector<1x12x16xf32>
    %c0_4 = arith.constant 0 : index
    %c0_5 = arith.constant 0 : index
    %c0_6 = arith.constant 0 : index
    %5 = vector.load %arg5[%c0_4, %c0_5, %c0_6] : memref<1x72x16xf32, #tpu.memory_space<vmem>>, vector<1x12x16xf32>
    tpu.vector_store %arg5[%c0_4, %c0_5, %c0_6], %4 {strides = array<i32>} : memref<1x72x16xf32, #tpu.memory_space<vmem>>, vector<1x12x16xf32>,
    %6 = vector.extract_strided_slice %0 {offsets = [0, 47, 0], sizes = [1, 1, 16], strides = [1, 1, 1]} : vector<1x48x16xf32> to vector<1x1x16xf32>
    %7 = vector.shape_cast %6 : vector<1x1x16xf32> to vector<1x1x16xf32>
    %8 = vector.broadcast %7 : vector<1x1x16xf32> to vector<1x12x16xf32>
    %c0_7 = arith.constant 0 : index
    %c60 = arith.constant 60 : index
    %c0_8 = arith.constant 0 : index
    %9 = vector.load %arg5[%c0_7, %c60, %c0_8] : memref<1x72x16xf32, #tpu.memory_space<vmem>>, vector<1x12x16xf32>
    tpu.vector_store %arg5[%c0_7, %c60, %c0_8], %8 {strides = array<i32>} : memref<1x72x16xf32, #tpu.memory_space<vmem>>, vector<1x12x16xf32>,
    %c0_9 = arith.constant 0 : index
    %c0_10 = arith.constant 0 : index
    %c0_11 = arith.constant 0 : index
    %10 = vector.load %arg5[%c0_9, %c0_10, %c0_11] : memref<1x72x16xf32, #tpu.memory_space<vmem>>, vector<1x72x16xf32>
    %11 = vector.extract_strided_slice %10 {offsets = [0, 0, 0], sizes = [1, 71, 16], strides = [1, 1, 1]} : vector<1x72x16xf32> to vector<1x71x16xf32>
    %12 = vector.extract_strided_slice %10 {offsets = [0, 1, 0], sizes = [1, 71, 16], strides = [1, 1, 1]} : vector<1x72x16xf32> to vector<1x71x16xf32>
    %13 = arith.addf %11, %12 : vector<1x71x16xf32>
    %14 = vector.extract_strided_slice %13 {offsets = [0, 0, 0], sizes = [1, 69, 16], strides = [1, 1, 1]} : vector<1x71x16xf32> to vector<1x69x16xf32>
    %15 = vector.extract_strided_slice %13 {offsets = [0, 2, 0], sizes = [1, 69, 16], strides = [1, 1, 1]} : vector<1x71x16xf32> to vector<1x69x16xf32>
    %16 = arith.addf %14, %15 : vector<1x69x16xf32>
    %17 = vector.extract_strided_slice %16 {offsets = [0, 0, 0], sizes = [1, 65, 16], strides = [1, 1, 1]} : vector<1x69x16xf32> to vector<1x65x16xf32>
    %18 = vector.extract_strided_slice %16 {offsets = [0, 4, 0], sizes = [1, 65, 16], strides = [1, 1, 1]} : vector<1x69x16xf32> to vector<1x65x16xf32>
    %19 = arith.addf %17, %18 : vector<1x65x16xf32>
    %20 = vector.extract_strided_slice %19 {offsets = [0, 0, 0], sizes = [1, 57, 16], strides = [1, 1, 1]} : vector<1x65x16xf32> to vector<1x57x16xf32>
    %21 = vector.extract_strided_slice %19 {offsets = [0, 8, 0], sizes = [1, 57, 16], strides = [1, 1, 1]} : vector<1x65x16xf32> to vector<1x57x16xf32>
    %22 = arith.addf %20, %21 : vector<1x57x16xf32>
    %23 = vector.extract_strided_slice %22 {offsets = [0, 0, 0], sizes = [1, 48, 16], strides = [1, 1, 1]} : vector<1x57x16xf32> to vector<1x48x16xf32>
    %24 = vector.extract_strided_slice %19 {offsets = [0, 16, 0], sizes = [1, 48, 16], strides = [1, 1, 1]} : vector<1x65x16xf32> to vector<1x48x16xf32>
    %25 = arith.addf %23, %24 : vector<1x48x16xf32>
    %26 = vector.extract_strided_slice %10 {offsets = [0, 24, 0], sizes = [1, 48, 16], strides = [1, 1, 1]} : vector<1x72x16xf32> to vector<1x48x16xf32>
    %27 = arith.addf %25, %26 : vector<1x48x16xf32>
    %cst = arith.constant 4.000000e-02 : f32
    %28 = vector.broadcast %cst : f32 to vector<1x48x16xf32>
    %29 = arith.mulf %27, %28 : vector<1x48x16xf32>
    %c0_12 = arith.constant 0 : index
    %c0_13 = arith.constant 0 : index
    %c0_14 = arith.constant 0 : index
    %30 = vector.load %arg3[%c0_12, %c0_13, %c0_14] : memref<1x48x16xf32, #tpu.memory_space<vmem>>, vector<1x48x16xf32>
    tpu.vector_store %arg3[%c0_12, %c0_13, %c0_14], %29 {strides = array<i32>} : memref<1x48x16xf32, #tpu.memory_space<vmem>>, vector<1x48x16xf32>,
    %31 = arith.subf %0, %29 : vector<1x48x16xf32>
    %c0_15 = arith.constant 0 : index
    %c0_16 = arith.constant 0 : index
    %c0_17 = arith.constant 0 : index
    %32 = vector.load %arg4[%c0_15, %c0_16, %c0_17] : memref<1x48x16xf32, #tpu.memory_space<vmem>>, vector<1x48x16xf32>
    tpu.vector_store %arg4[%c0_15, %c0_16, %c0_17], %31 {strides = array<i32>} : memref<1x48x16xf32, #tpu.memory_space<vmem>>, vector<1x48x16xf32>,
    return
  }
  func.func @transform_0(%arg0: i32, %arg1: i32) -> (i32, i32, i32) {
    %c0_i32 = arith.constant 0 : i32
    %c0_i32_0 = arith.constant 0 : i32
    return %arg0, %c0_i32, %arg1 : i32, i32, i32
  }
  func.func @transform_1(%arg0: i32, %arg1: i32) -> (i32, i32, i32) {
    %c0_i32 = arith.constant 0 : i32
    %c0_i32_0 = arith.constant 0 : i32
    return %arg0, %c0_i32, %arg1 : i32, i32, i32
  }
  func.func @transform_2(%arg0: i32, %arg1: i32) -> (i32, i32, i32) {
    %c0_i32 = arith.constant 0 : i32
    %c0_i32_0 = arith.constant 0 : i32
    return %arg0, %c0_i32, %arg1 : i32, i32, i32
  }
}

</mosaic_0001>

<llo_original>
// kernel: tpu_custom_call.1
$region0: #{tpu_custom_call.1}
  #allocation0 [shape = 'u32[]', space=smem, size = 0x4, offset = 0x4, fixed_abs, tag = 'smem constant byte address 0x4 - core index']
  #allocation1 [shape = 'u32[72,128]{1,0:T(1,128)}', space=vmem, size = 0x9000, scoped, tag = 'internal scratch']
  #allocation2 [shape = 'f32[1,72,16]{2,1,0:T(8,128)}', space=vmem, size = 0x9000, scoped, tag = 'scratch operand']
  %s0 = inlined_call_operand.vmem [shape: f32[1,48,16], index: 0, kind: input, shape index: {}]
  %s1 = inlined_call_operand.vmem [shape: f32[1,48,16], index: 1, kind: output, shape index: {0}]
  %s2 = inlined_call_operand.vmem [shape: f32[1,48,16], index: 2, kind: output, shape index: {1}]
  %3 = xla_tuple %s1, %s2
  %s4 = sld [smem:[#allocation0]]
  $region22: #{tpu_custom_call.1} parent=0
    _
  %s6 = ssub.s32 1, %s4
  %s7 = scalar_select 0, %s6, %s4
  // Predicated region
  $region2: #{tpu_custom_call.1} parent=0 // pred_check
    _
  $region3: #{tpu_custom_call.1} parent=0 // pred_check_branch
    %9 = sbr.rel (0) target = $region5
  $region4: #{tpu_custom_call.1} parent=0 // pred_region
    _
  $region5: #{tpu_custom_call.1} parent=0 // pred_fallthru
    _
  %v10 = vld [vmem:[%s0] sm:$0xff]
  %v11 = vld [vmem:[%s0 + $0x8] sm:$0xff]
  %v12 = vld [vmem:[%s0 + $0x10] sm:$0xff]
  %v13 = vld [vmem:[%s0 + $0x18] sm:$0xff]
  %v14 = vld [vmem:[%s0 + $0x20] sm:$0xff]
  %v15 = vld [vmem:[%s0 + $0x28] sm:$0xff]
  %vm16 = vcmask 130048
  %17 = vst.msk [vmem:[#allocation2 + $0xc] sm:$0xff] %vm16, %v10
  %18 = vst.msk [vmem:[#allocation2 + $0x14] sm:$0xff] %vm16, %v11
  %19 = vst.msk [vmem:[#allocation2 + $0x1c] sm:$0xff] %vm16, %v12
  %20 = vst.msk [vmem:[#allocation2 + $0x24] sm:$0xff] %vm16, %v13
  %21 = vst.msk [vmem:[#allocation2 + $0x2c] sm:$0xff] %vm16, %v14
  %22 = vst.msk [vmem:[#allocation2 + $0x34] sm:$0xff] %vm16, %v15
  %v23 = vperm.slane %v10, 0
  %24 = vst.msk [vmem:[#allocation2] sm:$0xff] %vm16, %v23
  %vm25 = vcmask 125952
  %26 = vst.msk [vmem:[#allocation2 + $0x8] sm:$0xf] %vm25, %v23
  %v27 = vperm.slane %v15, 7
  %28 = vst.msk [vmem:[#allocation2 + $0x3c] sm:$0xff] %vm16, %v27
  %29 = vst.msk [vmem:[#allocation2 + $0x44] sm:$0xf] %vm25, %v27
  %v30 = vld [vmem:[#allocation2] sm:$0xff]
  %v31 = vld [vmem:[#allocation2 + $0x8] sm:$0xff]
  %v32 = vld [vmem:[#allocation2 + $0x10] sm:$0xff]
  %v33 = vld [vmem:[#allocation2 + $0x18] sm:$0xff]
  %v34 = vld [vmem:[#allocation2 + $0x20] sm:$0xff]
  %v35 = vld [vmem:[#allocation2 + $0x28] sm:$0xff]
  %v36 = vld [vmem:[#allocation2 + $0x30] sm:$0xff]
  %v37 = vld [vmem:[#allocation2 + $0x38] sm:$0xff]
  %v38 = vld [vmem:[#allocation2 + $0x40] sm:$0xff]
  %vm48 = vcmask 1046528
  %v49 = vrot.slane %v30, 1
  %v50 = vrot.slane %v31, 1
  %v51 = vsel %vm48, %v49, %v50
  %v52 = vrot.slane %v32, 1
  %v53 = vsel %vm48, %v50, %v52
  %v54 = vrot.slane %v33, 1
  %v55 = vsel %vm48, %v52, %v54
  %v56 = vrot.slane %v34, 1
  %v57 = vsel %vm48, %v54, %v56
  %v58 = vrot.slane %v35, 1
  %v59 = vsel %vm48, %v56, %v58
  %v60 = vrot.slane %v36, 1
  %v61 = vsel %vm48, %v58, %v60
  %v62 = vrot.slane %v37, 1
  %v63 = vsel %vm48, %v60, %v62
  %v64 = vrot.slane %v38, 1
  %v65 = vsel %vm48, %v62, %v64
  %v75 = vadd.f32 %v30, %v51
  %v76 = vadd.f32 %v31, %v53
  %v77 = vadd.f32 %v32, %v55
  %v78 = vadd.f32 %v33, %v57
  %v79 = vadd.f32 %v34, %v59
  %v80 = vadd.f32 %v35, %v61
  %v81 = vadd.f32 %v36, %v63
  %v82 = vadd.f32 %v37, %v65
  %v83 = vadd.f32 %v38, %v64
  %vm93 = vcmask 1045504
  %v94 = vrot.slane %v75, 2
  %v95 = vrot.slane %v76, 2
  %v96 = vsel %vm93, %v94, %v95
  %v97 = vrot.slane %v77, 2
  %v98 = vsel %vm93, %v95, %v97
  %v99 = vrot.slane %v78, 2
  %v100 = vsel %vm93, %v97, %v99
  %v101 = vrot.slane %v79, 2
  %v102 = vsel %vm93, %v99, %v101
  %v103 = vrot.slane %v80, 2
  %v104 = vsel %vm93, %v101, %v103
  %v105 = vrot.slane %v81, 2
  %v106 = vsel %vm93, %v103, %v105
  %v107 = vrot.slane %v82, 2
  %v108 = vsel %vm93, %v105, %v107
  %v109 = vrot.slane %v83, 2
  %v110 = vsel %vm93, %v107, %v109
  %v120 = vadd.f32 %v75, %v96
  %v121 = vadd.f32 %v76, %v98
  %v122 = vadd.f32 %v77, %v100
  %v123 = vadd.f32 %v78, %v102
  %v124 = vadd.f32 %v79, %v104
  %v125 = vadd.f32 %v80, %v106
  %v126 = vadd.f32 %v81, %v108
  %v127 = vadd.f32 %v82, %v110
  %v128 = vadd.f32 %v83, %v109
  %vm138 = vcmask 1043456
  %v139 = vrot.slane %v120, 4
  %v140 = vrot.slane %v121, 4
  %v141 = vsel %vm138, %v139, %v140
  %v142 = vrot.slane %v122, 4
  %v143 = vsel %vm138, %v140, %v142
  %v144 = vrot.slane %v123, 4
  %v145 = vsel %vm138, %v142, %v144
  %v146 = vrot.slane %v124, 4
  %v147 = vsel %vm138, %v144, %v146
  %v148 = vrot.slane %v125, 4
  %v149 = vsel %vm138, %v146, %v148
  %v150 = vrot.slane %v126, 4
  %v151 = vsel %vm138, %v148, %v150
  %v152 = vrot.slane %v127, 4
  %v153 = vsel %vm138, %v150, %v152
  %v154 = vrot.slane %v128, 4
  %v155 = vsel %vm138, %v152, %v154
  %v164 = vadd.f32 %v120, %v141
  %v165 = vadd.f32 %v121, %v143
  %v166 = vadd.f32 %v122, %v145
  %v167 = vadd.f32 %v123, %v147
  %v168 = vadd.f32 %v124, %v149
  %v169 = vadd.f32 %v125, %v151
  %v170 = vadd.f32 %v126, %v153
  %v171 = vadd.f32 %v127, %v155
  %v172 = vadd.f32 %v164, %v165
  %v173 = vadd.f32 %v165, %v166
  %v174 = vadd.f32 %v166, %v167
  %v175 = vadd.f32 %v167, %v168
  %v176 = vadd.f32 %v168, %v169
  %v177 = vadd.f32 %v169, %v170
  %v178 = vadd.f32 %v172, %v166
  %v179 = vadd.f32 %v173, %v167
  %v180 = vadd.f32 %v174, %v168
  %v181 = vadd.f32 %v175, %v169
  %v182 = vadd.f32 %v176, %v170
  %v183 = vadd.f32 %v177, %v171
  %v184 = vadd.f32 %v178, %v33
  %v185 = vadd.f32 %v179, %v34
  %v186 = vadd.f32 %v180, %v35
  %v187 = vadd.f32 %v181, %v36
  %v188 = vadd.f32 %v182, %v37
  %v189 = vadd.f32 %v183, %v38
  %v190 = vmul.f32 %v184, 0.04
  %v191 = vmul.f32 %v185, 0.04
  %v192 = vmul.f32 %v186, 0.04
  %v193 = vmul.f32 %v187, 0.04
  %v194 = vmul.f32 %v188, 0.04
  %v195 = vmul.f32 %v189, 0.04
  %196 = vst.msk [vmem:[%s1] sm:$0xff] %vm16, %v190
  %197 = vst.msk [vmem:[%s1 + $0x8] sm:$0xff] %vm16, %v191
  %198 = vst.msk [vmem:[%s1 + $0x10] sm:$0xff] %vm16, %v192
  %199 = vst.msk [vmem:[%s1 + $0x18] sm:$0xff] %vm16, %v193
  %200 = vst.msk [vmem:[%s1 + $0x20] sm:$0xff] %vm16, %v194
  %201 = vst.msk [vmem:[%s1 + $0x28] sm:$0xff] %vm16, %v195
  %v202 = vsub.f32 %v10, %v190
  %v203 = vsub.f32 %v11, %v191
  %v204 = vsub.f32 %v12, %v192
  %v205 = vsub.f32 %v13, %v193
  %v206 = vsub.f32 %v14, %v194
  %v207 = vsub.f32 %v15, %v195
  %208 = vst.msk [vmem:[%s2] sm:$0xff] %vm16, %v202
  %209 = vst.msk [vmem:[%s2 + $0x8] sm:$0xff] %vm16, %v203
  %210 = vst.msk [vmem:[%s2 + $0x10] sm:$0xff] %vm16, %v204
  %211 = vst.msk [vmem:[%s2 + $0x18] sm:$0xff] %vm16, %v205
  %212 = vst.msk [vmem:[%s2 + $0x20] sm:$0xff] %vm16, %v206
  %213 = vst.msk [vmem:[%s2 + $0x28] sm:$0xff] %vm16, %v207
  // Predicated region
  $region6: #{tpu_custom_call.1} parent=0 // pred_check
    _
  $region7: #{tpu_custom_call.1} parent=0 // pred_check_branch
    %215 = sbr.rel (0) target = $region9
  $region8: #{tpu_custom_call.1} parent=0 // pred_region
    _
  $region9: #{tpu_custom_call.1} parent=0 // pred_fallthru
    _
  // Predicated region
  $region10: #{tpu_custom_call.1} parent=0 // pred_check
    _
  $region11: #{tpu_custom_call.1} parent=0 // pred_check_branch
    %217 = sbr.rel (0) target = $region13
  $region12: #{tpu_custom_call.1} parent=0 // pred_region
    _
  $region13: #{tpu_custom_call.1} parent=0 // pred_fallthru
    _
  // Predicated region
  $region14: #{tpu_custom_call.1} parent=0 // pred_check
    _
  $region15: #{tpu_custom_call.1} parent=0 // pred_check_branch
    %219 = sbr.rel (0) target = $region17
  $region16: #{tpu_custom_call.1} parent=0 // pred_region
    _
  $region17: #{tpu_custom_call.1} parent=0 // pred_fallthru
    _
  // Predicated region
  $region18: #{tpu_custom_call.1} parent=0 // pred_check
    _
  $region19: #{tpu_custom_call.1} parent=0 // pred_check_branch
    %221 = sbr.rel (0) target = $region21
  $region20: #{tpu_custom_call.1} parent=0 // pred_region
    _
  $region21: #{tpu_custom_call.1} parent=0 // pred_fallthru
    _

</llo_original>
